<compile_context>
chip_gen: v6e
topology: v6e:2x2x1
jax: 0.10.0
libtpu: 0.0.40
codegen_flags: <defaults>
</compile_context>

<pallas_src>
import functools

import jax
import jax.numpy as jnp
from jax import lax
from jax.experimental import pallas as pl
from jax.experimental.pallas import tpu as pltpu


def _head_flash_kernel(xq_ref, xkv_ref, w_ref, o_ref,
                       q_scr, m_scr, l_scr, acc_scr,
                       *, head_size, tq, tk, exp_dtype):
    """One (batch-block, q-tile, kv-tile) grid step of causal attention.

    xq_ref : (Bblk, tq, C)  f32   rows used as queries
    xkv_ref: (Bblk, tk, C)  f32   rows used as keys/values
    w_ref  : (C, 3H)        bf16  fused [Wq*scale | Wk | Wv]
    o_ref  : (Bblk, tq, H)  out_dtype
    """
    H = head_size
    qi = pl.program_id(1)
    ki = pl.program_id(2)
    nk = pl.num_programs(2)
    Bblk, _, C = xq_ref.shape

    q_start = qi * tq
    k_start = ki * tk

    @pl.when(ki == 0)
    def _init():
        # Project queries once per (batch-block, q-tile); 1/sqrt(C) is already
        # folded into the query weights.
        xq = xq_ref[...].astype(jnp.bfloat16).reshape(Bblk * tq, C)
        q = jnp.dot(xq, w_ref[:, 0:H], preferred_element_type=jnp.float32)
        q_scr[...] = q.reshape(Bblk, tq, H).astype(jnp.bfloat16)
        m_scr[...] = jnp.full_like(m_scr, -jnp.inf)
        l_scr[...] = jnp.zeros_like(l_scr)
        acc_scr[...] = jnp.zeros_like(acc_scr)

    # Structural causality: skip kv tiles lying entirely above the diagonal
    # (every key index > every query index in this q tile).
    @pl.when(k_start <= q_start + (tq - 1))
    def _compute():
        # Fused K|V projection for this kv tile: one MXU matmul with N = 2H.
        xkv = xkv_ref[...].astype(jnp.bfloat16).reshape(Bblk * tk, C)
        kv = jnp.dot(xkv, w_ref[:, H:3 * H], preferred_element_type=jnp.float32)
        kv = kv.reshape(Bblk, tk, 2 * H)
        k = kv[..., 0:H].astype(jnp.bfloat16)
        v = kv[..., H:2 * H].astype(jnp.bfloat16)

        # Scores: contract on H directly (no explicit transpose of k).
        q = q_scr[...]
        s = jnp.einsum('bqh,bkh->bqk', q, k,
                       preferred_element_type=jnp.float32)       # (Bblk,tq,tk)

        # Causal mask built once in 2D, broadcast over the batch dim.
        rows = q_start + lax.broadcasted_iota(jnp.int32, (tq, tk), 0)
        cols = k_start + lax.broadcasted_iota(jnp.int32, (tq, tk), 1)
        s = jnp.where((rows >= cols)[None, :, :], s, -jnp.inf)

        # Online softmax update: running stats stay f32; the per-element exp
        # runs in `exp_dtype` (bf16 on v6e/v7x EUP, f32 on v5e).
        m_prev = m_scr[...]
        m_new = jnp.maximum(m_prev, jnp.max(s, axis=-1, keepdims=True))
        alpha = jnp.exp(m_prev - m_new)                           # f32, tiny
        p = jnp.exp((s - m_new).astype(exp_dtype)).astype(jnp.float32)
        l_scr[...] = alpha * l_scr[...] + jnp.sum(p, axis=-1, keepdims=True)
        acc_scr[...] = alpha * acc_scr[...] + jnp.einsum(
            'bqk,bkh->bqh', p.astype(jnp.bfloat16), v,
            preferred_element_type=jnp.float32)
        m_scr[...] = m_new

    @pl.when(ki == nk - 1)
    def _finalize():
        # Dropout is identity in eval mode.
        inv_l = pl.reciprocal(l_scr[...], approx=True)            # EUP slot
        o_ref[...] = (acc_scr[...] * inv_l).astype(o_ref.dtype)


def _device_kind():
    try:
        return jax.devices()[0].device_kind.lower()
    except Exception:  # pragma: no cover - defensive
        return ""


def _tile_candidates(T):
    """Divisors of T that are multiples of 8 (or T itself), descending."""
    return [d for d in range(T, 0, -1) if T % d == 0 and (d % 8 == 0 or d == T)]


def _divisors_desc(n):
    return [d for d in range(n, 0, -1) if n % d == 0]


def _vmem_bytes(bblk, tq, tk, C, H, x_bytes, out_bytes):
    """Rough per-step VMEM footprint (double-buffered I/O + scratch + interm)."""
    xq = bblk * tq * C * x_bytes * 2
    xkv = bblk * tk * C * x_bytes * 2
    w = C * 3 * H * 2 * 2
    out = bblk * tq * H * out_bytes * 2
    scratch = bblk * tq * (H * 2 + 8 + H * 4)
    interm = bblk * (tk * 2 * H * 4 + 2 * tq * tk * 4 + 2 * tq * H * 4)
    return int((xq + xkv + w + out + scratch + interm) * 1.5)


def head_forward(x, w_key, w_query, w_value, *, out_dtype=None,
                 batch_block=None, q_tile=None, kv_tile=None):
    """Single-head causal self-attention (eval mode), flash-style.

    Args:
      x:        (B, T, C) float32
      w_key:    (C, H) float32   (== PyTorch key.weight.T)
      w_query:  (C, H) float32
      w_value:  (C, H) float32
      out_dtype: output dtype (defaults to x.dtype; pass bf16 to halve writeback).
    Returns:
      (B, T, H) out_dtype
    """
    B, T, C = x.shape
    H = w_key.shape[1]
    scale = float(C) ** -0.5
    out_dtype = x.dtype if out_dtype is None else out_dtype

    # Fuse [Wq*scale | Wk | Wv] -> (C, 3H) in bf16; the scale fold is free here.
    w_bf = jnp.concatenate([w_query * scale, w_key, w_value],
                           axis=1).astype(jnp.bfloat16)

    kind = _device_kind()
    is_old = any(g in kind for g in ("v2", "v3", "v4", "v5"))
    is_v7 = "v7" in kind
    # MXU-row target per step and VMEM budget are generation-aware.
    row_target = 128 if is_old else (256 if is_v7 else 512)
    vmem_budget = (40 << 20) if is_v7 else (96 << 20)
    exp_dtype = jnp.float32 if is_old else jnp.bfloat16

    # Sequence tiles: largest divisor of T that is a multiple of 8, capped.
    tile_cands = _tile_candidates(T)
    seq_cap = min(T, 512)
    if q_tile is None:
        q_tile = next(d for d in tile_cands if d <= seq_cap)
    if kv_tile is None:
        kv_tile = next(d for d in tile_cands if d <= seq_cap)

    if batch_block is None:
        target_b = max(1, row_target // max(q_tile, 1))
        batch_block = next(d for d in _divisors_desc(B) if d <= target_b)
    # Keep >= 2 "parallel" grid steps so both v7x TensorCores get work.
    while batch_block > 1 and (B // batch_block) * (T // q_tile) < 2:
        batch_block = next(d for d in _divisors_desc(B) if d < batch_block)

    x_bytes = x.dtype.itemsize
    out_bytes = jnp.dtype(out_dtype).itemsize
    # Shrink tiles if the VMEM estimate overshoots the per-generation budget.
    while _vmem_bytes(batch_block, q_tile, kv_tile, C, H,
                      x_bytes, out_bytes) > vmem_budget:
        if kv_tile > tile_cands[-1]:
            kv_tile = next(d for d in tile_cands if d < kv_tile)
        elif q_tile > tile_cands[-1]:
            q_tile = next(d for d in tile_cands if d < q_tile)
        elif batch_block > 1:
            batch_block = next(d for d in _divisors_desc(B) if d < batch_block)
        else:
            break

    grid = (B // batch_block, T // q_tile, T // kv_tile)
    vmem_limit = int(min(
        vmem_budget,
        max(2 * _vmem_bytes(batch_block, q_tile, kv_tile, C, H,
                            x_bytes, out_bytes), 32 << 20)))

    kernel = functools.partial(_head_flash_kernel, head_size=H,
                               tq=q_tile, tk=kv_tile, exp_dtype=exp_dtype)

    return pl.pallas_call(
        kernel,
        out_shape=jax.ShapeDtypeStruct((B, T, H), out_dtype),
        grid_spec=pltpu.PrefetchScalarGridSpec(
            num_scalar_prefetch=0,
            grid=grid,
            in_specs=[
                # x rows for queries (native f32; cast after DMA in-kernel).
                pl.BlockSpec((batch_block, q_tile, C),
                             lambda b, qi, ki: (b, qi, 0)),
                # x rows for keys/values.
                pl.BlockSpec((batch_block, kv_tile, C),
                             lambda b, qi, ki: (b, ki, 0)),
                # Fused bf16 weights, constant block across the grid.
                pl.BlockSpec((C, 3 * H), lambda b, qi, ki: (0, 0)),
            ],
            out_specs=pl.BlockSpec((batch_block, q_tile, H),
                                   lambda b, qi, ki: (b, qi, 0)),
            scratch_shapes=[
                pltpu.VMEM((batch_block, q_tile, H), jnp.bfloat16),   # q
                pltpu.VMEM((batch_block, q_tile, 1), jnp.float32),    # m
                pltpu.VMEM((batch_block, q_tile, 1), jnp.float32),    # l
                pltpu.VMEM((batch_block, q_tile, H), jnp.float32),    # acc
            ],
        ),
        compiler_params=pltpu.CompilerParams(
            dimension_semantics=("parallel", "parallel", "arbitrary"),
            vmem_limit_bytes=vmem_limit,
        ),
    )(x, x, w_bf)


def _reference(x, w_key, w_query, w_value):
    """Pure-JAX f32 reference mirroring the PyTorch forward (eval mode)."""
    B, T, C = x.shape
    k = x @ w_key
    q = x @ w_query
    v = x @ w_value
    wei = (q @ jnp.swapaxes(k, -2, -1)) * (C ** -0.5)
    mask = jnp.tril(jnp.ones((T, T), dtype=bool))
    wei = jnp.where(mask[None, :, :], wei, -jnp.inf)
    wei = jax.nn.softmax(wei, axis=-1)
    return wei @ v


if __name__ == "__main__":
    # Small shapes consistent with the module: batch=2, seq (block_size)=8,
    # n_embd=32, head_size=16.
    B, T, C, Hd = 2, 8, 32, 16

    key = jax.random.PRNGKey(0)
    kx, kk, kq, kv = jax.random.split(key, 4)

    x = jax.random.normal(kx, (B, T, C), dtype=jnp.float32)
    # Deterministic "parameter" init (stands in for nn.Linear weights).
    w_key = jax.random.normal(kk, (C, Hd), dtype=jnp.float32) * (C ** -0.5)
    w_query = jax.random.normal(kq, (C, Hd), dtype=jnp.float32) * (C ** -0.5)
    w_value = jax.random.normal(kv, (C, Hd), dtype=jnp.float32) * (C ** -0.5)

    out = head_forward(x, w_key, w_query, w_value)
    out = jax.block_until_ready(out)

    ref = _reference(x, w_key, w_query, w_value)
    assert out.shape == (B, T, Hd), out.shape
    max_err = float(jnp.max(jnp.abs(out - ref)))
    # bf16 MXU inputs + bf16 exp (on v6e/v7x) with f32 accumulation -> small
    # quantization error vs the f32 reference.
    assert jnp.allclose(out, ref, atol=5e-2, rtol=5e-2), (
        f"mismatch vs reference (max abs err {max_err})")

    print("KERNEL_OK")
</pallas_src>

<mosaic_0001>
module attributes {stable_mosaic.version = 11 : i64} {
  func.func @_head_flash_kernel(%arg0: i32, %arg1: i32, %arg2: i32, %arg3: memref<1x8x32xf32, #tpu.memory_space<vmem>>, %arg4: memref<1x8x32xf32, #tpu.memory_space<vmem>>, %arg5: memref<32x48xbf16, #tpu.memory_space<vmem>>, %arg6: memref<1x8x16xf32, #tpu.memory_space<vmem>>, %arg7: memref<1x8x16xbf16, #tpu.memory_space<vmem>>, %arg8: memref<1x8x1xf32, #tpu.memory_space<vmem>>, %arg9: memref<1x8x1xf32, #tpu.memory_space<vmem>>, %arg10: memref<1x8x16xf32, #tpu.memory_space<vmem>>) attributes {dimension_semantics = [#tpu.dimension_semantics<parallel>, #tpu.dimension_semantics<parallel>, #tpu.dimension_semantics<arbitrary>], iteration_bounds = array<i64: 2, 1, 1>, scalar_prefetch = 0 : i64, scratch_operands = 4 : i64, tpu.core_type = #tpu.core_type<tc>, window_params = [{transform_indices = @transform_0, window_bounds = array<i64: 1, 8, 32>}, {transform_indices = @transform_1, window_bounds = array<i64: 1, 8, 32>}, {pipeline_mode = #tpu.pipeline_mode<synchronous>, transform_indices = @transform_2, window_bounds = array<i64: 32, 48>}, {transform_indices = @transform_3, window_bounds = array<i64: 1, 8, 16>}]} {
    %c8_i32 = arith.constant 8 : i32
    %0 = arith.muli %arg1, %c8_i32 : i32
    %c8_i32_0 = arith.constant 8 : i32
    %1 = arith.muli %arg2, %c8_i32_0 : i32
    %c0_i32 = arith.constant 0 : i32
    %2 = arith.cmpi eq, %arg2, %c0_i32 : i32
    %3 = arith.extui %2 : i1 to i32
    %c0_i32_1 = arith.constant 0 : i32
    %4 = arith.cmpi ne, %3, %c0_i32_1 : i32
    scf.if %4 {
      %c0 = arith.constant 0 : index
      %c0_5 = arith.constant 0 : index
      %c0_6 = arith.constant 0 : index
      %12 = vector.load %arg3[%c0, %c0_5, %c0_6] : memref<1x8x32xf32, #tpu.memory_space<vmem>>, vector<1x8x32xf32>
      %13 = arith.truncf %12 : vector<1x8x32xf32> to vector<1x8x32xbf16>
      %14 = vector.shape_cast %13 : vector<1x8x32xbf16> to vector<8x32xbf16>
      %c0_7 = arith.constant 0 : index
      %c0_8 = arith.constant 0 : index
      %15 = vector.load %arg5[%c0_7, %c0_8] : memref<32x48xbf16, #tpu.memory_space<vmem>>, vector<32x16xbf16>
      %cst = arith.constant dense<0.000000e+00> : vector<8x16xf32>
      %16 = tpu.matmul %14, %15, %cst {dimension_numbers = #tpu.dot_dimension_numbers<[1], [0], [0], [1], [0, 0, 1, 1], [], []>} : vector<8x32xbf16>, vector<32x16xbf16>, vector<8x16xf32> -> vector<8x16xf32>
      %17 = vector.shape_cast %16 : vector<8x16xf32> to vector<1x8x16xf32>
      %18 = arith.truncf %17 : vector<1x8x16xf32> to vector<1x8x16xbf16>
      %c0_9 = arith.constant 0 : index
      %c0_10 = arith.constant 0 : index
      %c0_11 = arith.constant 0 : index
      %19 = vector.load %arg7[%c0_9, %c0_10, %c0_11] : memref<1x8x16xbf16, #tpu.memory_space<vmem>>, vector<1x8x16xbf16>
      tpu.vector_store %arg7[%c0_9, %c0_10, %c0_11], %18 {strides = array<i32>} : memref<1x8x16xbf16, #tpu.memory_space<vmem>>, vector<1x8x16xbf16>,
      %cst_12 = arith.constant 0xFF800000 : f32
      %20 = vector.broadcast %cst_12 : f32 to vector<1x8x1xf32>
      %c0_13 = arith.constant 0 : index
      %c0_14 = arith.constant 0 : index
      %c0_15 = arith.constant 0 : index
      %21 = vector.load %arg8[%c0_13, %c0_14, %c0_15] : memref<1x8x1xf32, #tpu.memory_space<vmem>>, vector<1x8x1xf32>
      tpu.vector_store %arg8[%c0_13, %c0_14, %c0_15], %20 {strides = array<i32>} : memref<1x8x1xf32, #tpu.memory_space<vmem>>, vector<1x8x1xf32>,
      %cst_16 = arith.constant 0.000000e+00 : f32
      %22 = vector.broadcast %cst_16 : f32 to vector<1x8x1xf32>
      %c0_17 = arith.constant 0 : index
      %c0_18 = arith.constant 0 : index
      %c0_19 = arith.constant 0 : index
      %23 = vector.load %arg9[%c0_17, %c0_18, %c0_19] : memref<1x8x1xf32, #tpu.memory_space<vmem>>, vector<1x8x1xf32>
      tpu.vector_store %arg9[%c0_17, %c0_18, %c0_19], %22 {strides = array<i32>} : memref<1x8x1xf32, #tpu.memory_space<vmem>>, vector<1x8x1xf32>,
      %cst_20 = arith.constant 0.000000e+00 : f32
      %24 = vector.broadcast %cst_20 : f32 to vector<1x8x16xf32>
      %c0_21 = arith.constant 0 : index
      %c0_22 = arith.constant 0 : index
      %c0_23 = arith.constant 0 : index
      %25 = vector.load %arg10[%c0_21, %c0_22, %c0_23] : memref<1x8x16xf32, #tpu.memory_space<vmem>>, vector<1x8x16xf32>
      tpu.vector_store %arg10[%c0_21, %c0_22, %c0_23], %24 {strides = array<i32>} : memref<1x8x16xf32, #tpu.memory_space<vmem>>, vector<1x8x16xf32>,
    } else {
    }
    %c7_i32 = arith.constant 7 : i32
    %5 = arith.addi %0, %c7_i32 : i32
    %6 = arith.cmpi sle, %1, %5 : i32
    %7 = arith.extui %6 : i1 to i32
    %c0_i32_2 = arith.constant 0 : i32
    %8 = arith.cmpi ne, %7, %c0_i32_2 : i32
    scf.if %8 {
      %c0 = arith.constant 0 : index
      %c0_5 = arith.constant 0 : index
      %c0_6 = arith.constant 0 : index
      %12 = vector.load %arg4[%c0, %c0_5, %c0_6] : memref<1x8x32xf32, #tpu.memory_space<vmem>>, vector<1x8x32xf32>
      %13 = arith.truncf %12 : vector<1x8x32xf32> to vector<1x8x32xbf16>
      %14 = vector.shape_cast %13 : vector<1x8x32xbf16> to vector<8x32xbf16>
      %c0_7 = arith.constant 0 : index
      %c16 = arith.constant 16 : index
      %15 = vector.load %arg5[%c0_7, %c16] : memref<32x48xbf16, #tpu.memory_space<vmem>>, vector<32x32xbf16>
      %cst = arith.constant dense<0.000000e+00> : vector<8x32xf32>
      %16 = tpu.matmul %14, %15, %cst {dimension_numbers = #tpu.dot_dimension_numbers<[1], [0], [0], [1], [0, 0, 1, 1], [], []>} : vector<8x32xbf16>, vector<32x32xbf16>, vector<8x32xf32> -> vector<8x32xf32>
      %17 = vector.shape_cast %16 : vector<8x32xf32> to vector<1x8x32xf32>
      %18 = vector.extract_strided_slice %17 {offsets = [0, 0, 0], sizes = [1, 8, 16], strides = [1, 1, 1]} : vector<1x8x32xf32> to vector<1x8x16xf32>
      %19 = arith.truncf %18 : vector<1x8x16xf32> to vector<1x8x16xbf16>
      %20 = vector.extract_strided_slice %17 {offsets = [0, 0, 16], sizes = [1, 8, 16], strides = [1, 1, 1]} : vector<1x8x32xf32> to vector<1x8x16xf32>
      %21 = arith.truncf %20 : vector<1x8x16xf32> to vector<1x8x16xbf16>
      %c0_8 = arith.constant 0 : index
      %c0_9 = arith.constant 0 : index
      %c0_10 = arith.constant 0 : index
      %22 = vector.load %arg7[%c0_8, %c0_9, %c0_10] : memref<1x8x16xbf16, #tpu.memory_space<vmem>>, vector<1x8x16xbf16>
      "tpu.trace_start"() <{level = 10 : i32, message = "bqh,bkh->bqk"}> : () -> ()
      %cst_11 = arith.constant dense<0.000000e+00> : vector<1x8x8xf32>
      %23 = tpu.matmul %22, %19, %cst_11 {dimension_numbers = #tpu.dot_dimension_numbers<[2], [2], [1], [1], [0, 0, 0, 1, 1, 1], [0], [0]>} : vector<1x8x16xbf16>, vector<1x8x16xbf16>, vector<1x8x8xf32> -> vector<1x8x8xf32>
      "tpu.trace_stop"() : () -> ()
      %24 = tpu.iota {dimensions = array<i32: 0>} : vector<8x8xi32>
      %25 = vector.broadcast %0 : i32 to vector<8x8xi32>
      %26 = arith.addi %25, %24 : vector<8x8xi32>
      %27 = tpu.iota {dimensions = array<i32: 1>} : vector<8x8xi32>
      %28 = vector.broadcast %1 : i32 to vector<8x8xi32>
      %29 = arith.addi %28, %27 : vector<8x8xi32>
      %30 = arith.cmpi sge, %26, %29 : vector<8x8xi32>
      %31 = vector.shape_cast %30 : vector<8x8xi1> to vector<1x8x8xi1>
      %cst_12 = arith.constant 0xFF800000 : f32
      %32 = vector.broadcast %cst_12 : f32 to vector<1x8x8xf32>
      %33 = arith.select %31, %23, %32 : vector<1x8x8xi1>, vector<1x8x8xf32>
      %c0_13 = arith.constant 0 : index
      %c0_14 = arith.constant 0 : index
      %c0_15 = arith.constant 0 : index
      %34 = vector.load %arg8[%c0_13, %c0_14, %c0_15] : memref<1x8x1xf32, #tpu.memory_space<vmem>>, vector<1x8x1xf32>
      %cst_16 = arith.constant dense<0xFF800000> : vector<1x8xf32>
      %35 = vector.multi_reduction <maximumf>, %33, %cst_16 [2] : vector<1x8x8xf32> to vector<1x8xf32>
      %36 = vector.shape_cast %35 : vector<1x8xf32> to vector<1x8x1xf32>
      %37 = arith.maximumf %34, %36 : vector<1x8x1xf32>
      %38 = arith.subf %34, %37 : vector<1x8x1xf32>
      %39 = math.exp %38 : vector<1x8x1xf32>
      %40 = vector.broadcast %37 : vector<1x8x1xf32> to vector<1x8x8xf32>
      %41 = arith.subf %33, %40 : vector<1x8x8xf32>
      %42 = arith.truncf %41 : vector<1x8x8xf32> to vector<1x8x8xbf16>
      %43 = math.exp %42 : vector<1x8x8xbf16>
      %44 = arith.extf %43 : vector<1x8x8xbf16> to vector<1x8x8xf32>
      %c0_17 = arith.constant 0 : index
      %c0_18 = arith.constant 0 : index
      %c0_19 = arith.constant 0 : index
      %45 = vector.load %arg9[%c0_17, %c0_18, %c0_19] : memref<1x8x1xf32, #tpu.memory_space<vmem>>, vector<1x8x1xf32>
      %46 = arith.mulf %39, %45 : vector<1x8x1xf32>
      %cst_20 = arith.constant dense<0.000000e+00> : vector<1x8xf32>
      %47 = vector.multi_reduction <add>, %44, %cst_20 [2] : vector<1x8x8xf32> to vector<1x8xf32>
      %48 = vector.shape_cast %47 : vector<1x8xf32> to vector<1x8x1xf32>
      %49 = arith.addf %46, %48 : vector<1x8x1xf32>
      %c0_21 = arith.constant 0 : index
      %c0_22 = arith.constant 0 : index
      %c0_23 = arith.constant 0 : index
      %50 = vector.load %arg9[%c0_21, %c0_22, %c0_23] : memref<1x8x1xf32, #tpu.memory_space<vmem>>, vector<1x8x1xf32>
      tpu.vector_store %arg9[%c0_21, %c0_22, %c0_23], %49 {strides = array<i32>} : memref<1x8x1xf32, #tpu.memory_space<vmem>>, vector<1x8x1xf32>,
      %c0_24 = arith.constant 0 : index
      %c0_25 = arith.constant 0 : index
      %c0_26 = arith.constant 0 : index
      %51 = vector.load %arg10[%c0_24, %c0_25, %c0_26] : memref<1x8x16xf32, #tpu.memory_space<vmem>>, vector<1x8x16xf32>
      %52 = vector.broadcast %39 : vector<1x8x1xf32> to vector<1x8x16xf32>
      %53 = arith.mulf %52, %51 : vector<1x8x16xf32>
      %54 = arith.truncf %44 : vector<1x8x8xf32> to vector<1x8x8xbf16>
      "tpu.trace_start"() <{level = 10 : i32, message = "bqk,bkh->bqh"}> : () -> ()
      %cst_27 = arith.constant dense<0.000000e+00> : vector<1x8x16xf32>
      %55 = tpu.matmul %54, %21, %cst_27 {dimension_numbers = #tpu.dot_dimension_numbers<[2], [1], [1], [2], [0, 0, 0, 1, 1, 2], [0], [0]>} : vector<1x8x8xbf16>, vector<1x8x16xbf16>, vector<1x8x16xf32> -> vector<1x8x16xf32>
      "tpu.trace_stop"() : () -> ()
      %56 = arith.addf %53, %55 : vector<1x8x16xf32>
      %c0_28 = arith.constant 0 : index
      %c0_29 = arith.constant 0 : index
      %c0_30 = arith.constant 0 : index
      %57 = vector.load %arg10[%c0_28, %c0_29, %c0_30] : memref<1x8x16xf32, #tpu.memory_space<vmem>>, vector<1x8x16xf32>
      tpu.vector_store %arg10[%c0_28, %c0_29, %c0_30], %56 {strides = array<i32>} : memref<1x8x16xf32, #tpu.memory_space<vmem>>, vector<1x8x16xf32>,
      %c0_31 = arith.constant 0 : index
      %c0_32 = arith.constant 0 : index
      %c0_33 = arith.constant 0 : index
      %58 = vector.load %arg8[%c0_31, %c0_32, %c0_33] : memref<1x8x1xf32, #tpu.memory_space<vmem>>, vector<1x8x1xf32>
      tpu.vector_store %arg8[%c0_31, %c0_32, %c0_33], %37 {strides = array<i32>} : memref<1x8x1xf32, #tpu.memory_space<vmem>>, vector<1x8x1xf32>,
    } else {
    }
    %c0_i32_3 = arith.constant 0 : i32
    %9 = arith.cmpi eq, %arg2, %c0_i32_3 : i32
    %10 = arith.extui %9 : i1 to i32
    %c0_i32_4 = arith.constant 0 : i32
    %11 = arith.cmpi ne, %10, %c0_i32_4 : i32
    scf.if %11 {
      %c0 = arith.constant 0 : index
      %c0_5 = arith.constant 0 : index
      %c0_6 = arith.constant 0 : index
      %12 = vector.load %arg9[%c0, %c0_5, %c0_6] : memref<1x8x1xf32, #tpu.memory_space<vmem>>, vector<1x8x1xf32>
      %13 = tpu.reciprocal %12 {approx = true} : vector<1x8x1xf32> -> vector<1x8x1xf32>
      %c0_7 = arith.constant 0 : index
      %c0_8 = arith.constant 0 : index
      %c0_9 = arith.constant 0 : index
      %14 = vector.load %arg10[%c0_7, %c0_8, %c0_9] : memref<1x8x16xf32, #tpu.memory_space<vmem>>, vector<1x8x16xf32>
      %15 = vector.broadcast %13 : vector<1x8x1xf32> to vector<1x8x16xf32>
      %16 = arith.mulf %14, %15 : vector<1x8x16xf32>
      %c0_10 = arith.constant 0 : index
      %c0_11 = arith.constant 0 : index
      %c0_12 = arith.constant 0 : index
      %17 = vector.load %arg6[%c0_10, %c0_11, %c0_12] : memref<1x8x16xf32, #tpu.memory_space<vmem>>, vector<1x8x16xf32>
      tpu.vector_store %arg6[%c0_10, %c0_11, %c0_12], %16 {strides = array<i32>} : memref<1x8x16xf32, #tpu.memory_space<vmem>>, vector<1x8x16xf32>,
    } else {
    }
    return
  }
  func.func @transform_0(%arg0: i32, %arg1: i32, %arg2: i32) -> (i32, i32, i32) {
    %c0_i32 = arith.constant 0 : i32
    %c0_i32_0 = arith.constant 0 : i32
    return %arg0, %arg1, %c0_i32 : i32, i32, i32
  }
  func.func @transform_1(%arg0: i32, %arg1: i32, %arg2: i32) -> (i32, i32, i32) {
    %c0_i32 = arith.constant 0 : i32
    %c0_i32_0 = arith.constant 0 : i32
    return %arg0, %arg2, %c0_i32 : i32, i32, i32
  }
  func.func @transform_2(%arg0: i32, %arg1: i32, %arg2: i32) -> (i32, i32) {
    %c0_i32 = arith.constant 0 : i32
    %c0_i32_0 = arith.constant 0 : i32
    %c0_i32_1 = arith.constant 0 : i32
    return %c0_i32, %c0_i32_0 : i32, i32
  }
  func.func @transform_3(%arg0: i32, %arg1: i32, %arg2: i32) -> (i32, i32, i32) {
    %c0_i32 = arith.constant 0 : i32
    %c0_i32_0 = arith.constant 0 : i32
    return %arg0, %arg1, %c0_i32 : i32, i32, i32
  }
}

</mosaic_0001>

<llo_original>
// kernel: tpu_custom_call.1
$region0: #{tpu_custom_call.1}
  #allocation0 [shape = 'u32[]', space=smem, size = 0x4, offset = 0x4, fixed_abs, tag = 'smem constant byte address 0x4 - core index']
  #allocation1 [shape = 'u32[144,128]{1,0:T(1,128)}', space=vmem, size = 0x12000, scoped, tag = 'internal scratch']
  #allocation2 [shape = 'bf16[1,8,16]{2,1,0:T(8,128)(2,1)}', space=vmem, size = 0x800, scoped, tag = 'scratch operand']
  #allocation3 [shape = 'f32[1,8,1]{2,1,0:T(8,128)}', space=vmem, size = 0x1000, scoped, tag = 'scratch operand']
  #allocation4 [shape = 'f32[1,8,1]{2,1,0:T(8,128)}', space=vmem, size = 0x1000, scoped, tag = 'scratch operand']
  #allocation5 [shape = 'f32[1,8,16]{2,1,0:T(8,128)}', space=vmem, size = 0x1000, scoped, tag = 'scratch operand']
  %s0 = inlined_call_operand.hbm [shape: f32[2,8,32], index: 0, kind: input, shape index: {}]
  %s1 = inlined_call_operand.hbm [shape: f32[2,8,32], index: 1, kind: input, shape index: {}]
  %s2 = inlined_call_operand.hbm [shape: bf16[32,48], index: 2, kind: input, shape index: {}]
  %s3 = inlined_call_operand.hbm [shape: f32[2,8,16], index: 3, kind: output, shape index: {}]
  %s4 = sld [smem:[#allocation0]]
  $region69: #{tpu_custom_call.1} parent=0
    _
  %s6 = ssub.s32 1, %s4
  %s7 = scalar_select 0, %s6, %s4
  $region1: #{tpu_custom_call.1} parent=0
    #allocation6 [shape = 'u8[8192]{0}', space=vmem, size = 0x2000, scoped, tag = 'input window, operand 0']
    #allocation7 [shape = 's32[2]{0}', space=sflag, size = 0x8, scoped, tag = 'scoped memory for tpu_custom_call.1']
    #allocation8 [shape = 's32[2]{0}', space=sflag, size = 0x8, scoped, tag = 'scoped memory for tpu_custom_call.1']
    #allocation9 [shape = 'u8[8192]{0}', space=vmem, size = 0x2000, scoped, tag = 'input window, operand 1']
    #allocation10 [shape = 's32[2]{0}', space=sflag, size = 0x8, scoped, tag = 'scoped memory for tpu_custom_call.1']
    #allocation11 [shape = 'u8[8192]{0}', space=vmem, size = 0x2000, scoped, tag = 'input window, operand 2, single buffered']
    #allocation12 [shape = 'u8[8192]{0}', space=vmem, size = 0x2000, scoped, tag = 'output window, operand 0']
    %8 = vsyncpa [#allocation7], 0
    %s9 = scalar_lea.sflag [#allocation7], 1
    %10 = vsyncpa %s9, 0
    %11 = vsyncpa [#allocation10], 0
    %s12 = scalar_lea.sflag [#allocation10], 1
    %13 = vsyncpa %s12, 0
    %14 = vsyncpa [#allocation8], 0
    %s15 = scalar_lea.sflag [#allocation8], 1
    %16 = vsyncpa %s15, 0
    loop: start=0, step=1, limit=4
    $region2: #{tpu_custom_call.1} parent=1 // loop_pre_header
      _
    $region3: #{tpu_custom_call.1} parent=1 // loop_header
      %s18 = sphi 0, %s22
      %p19 = scmp.ge.s32.totalorder %s18, 4
      %s25 = sphi 0, %s44
      %s26 = sphi 0, %s40
      %s27 = sphi 0, %s36
      %s28 = sphi 0, %s25
      %s29 = sphi 0, %s26
      %s30 = sphi 0, %s27
      %s31 = sphi 0, %s28
      %s32 = sphi 0, %s29
      %s33 = sphi 0, %s30
      %s49 = sphi 0, %s51
      %s52 = sphi 0, %s49
      %s53 = sphi 0, %s52
      %s69 = sphi 0, %s53
      %s77 = sphi 0, %s79
      %s80 = sphi 0, %s77
      %s81 = sphi 0, %s80
      %s97 = sphi 0, %s81
      %s101 = sphi 0, %s101
      %s103 = sphi 0, %s101
      %s104 = sphi 0, %s103
      %s118 = sphi 0, %s104
      %s126 = sphi 0, %s128
      %s129 = sphi 0, %s126
      %s130 = sphi 0, %s129
      %s146 = sphi 0, %s130
    $region4: #{tpu_custom_call.1} parent=1 // loop_header_branch
      %21 = sbr.rel (%p19) target = $region8
    $region5: #{tpu_custom_call.1} parent=1 // loop_body
      %s23 = ssub.s32 %s18, 1
      %s24 = ssub.s32 %s18, 2
      %s34 = sadd.s32 1, %s27
      %p35 = scmp.ge.s32.totalorder %s34, 1
      %s36 = scalar_select %p35, 0, %s34
      %s37 = sadd.s32 1, %s26
      %s38 = scalar_select %p35, %s37, %s26
      %p39 = scmp.ge.s32.totalorder %s38, 1
      %s40 = scalar_select %p39, 0, %s38
      %s41 = sadd.s32 1, %s25
      %s42 = scalar_select %p39, %s41, %s25
      %p43 = scmp.ge.s32.totalorder %s42, 2
      %s44 = scalar_select %p43, 0, %s42
      %s45 = ssub.s32 %s25, %s44
      %s46 = ssub.s32 %s26, %s40
      %s47 = sor.u32 %s45, %s46
      %p48 = scmp.eq.s32.totalorder %s47, 0
      %s50 = sadd.s32 %s49, 1
      %s51 = scalar_select %p48, %s49, %s50
      %p54 = pneg %p48
      %p55 = scmp.eq.s32.totalorder %s18, 1
      %p56 = por %p54, %p55
      %p57 = scmp.ne.s32.totalorder %s49, %s52
      %p58 = scmp.eq.s32.totalorder %s18, 0
      %p59 = por %p57, %p58
      %p60 = scmp.ne.s32.totalorder %s49, %s52
      %p61 = scmp.eq.s32.totalorder %s23, 1
      %p62 = por %p60, %p61
      %p63 = scmp.ne.s32.totalorder %s52, %s53
      %p64 = scmp.eq.s32.totalorder %s23, 0
      %p65 = por %p63, %p64
      %p66 = scmp.ne.s32.totalorder %s52, %s53
      %p67 = scmp.eq.s32.totalorder %s24, 1
      %p68 = por %p66, %p67
      %p70 = scmp.ne.s32.totalorder %s53, %s69
      %p71 = scmp.eq.s32.totalorder %s24, 0
      %p72 = por %p70, %p71
      %s73 = ssub.s32 %s25, %s44
      %s74 = ssub.s32 %s27, %s36
      %s75 = sor.u32 %s73, %s74
      %p76 = scmp.eq.s32.totalorder %s75, 0
      %s78 = sadd.s32 %s77, 1
      %s79 = scalar_select %p76, %s77, %s78
      %p82 = pneg %p76
      %p83 = scmp.eq.s32.totalorder %s18, 1
      %p84 = por %p82, %p83
      %p85 = scmp.ne.s32.totalorder %s77, %s80
      %p86 = scmp.eq.s32.totalorder %s18, 0
      %p87 = por %p85, %p86
      %p88 = scmp.ne.s32.totalorder %s77, %s80
      %p89 = scmp.eq.s32.totalorder %s23, 1
      %p90 = por %p88, %p89
      %p91 = scmp.ne.s32.totalorder %s80, %s81
      %p92 = scmp.eq.s32.totalorder %s23, 0
      %p93 = por %p91, %p92
      %p94 = scmp.ne.s32.totalorder %s80, %s81
      %p95 = scmp.eq.s32.totalorder %s24, 1
      %p96 = por %p94, %p95
      %p98 = scmp.ne.s32.totalorder %s81, %s97
      %p99 = scmp.eq.s32.totalorder %s24, 0
      %p100 = por %p98, %p99
      %s102 = sadd.s32 %s101, 1
      %p105 = scmp.eq.s32.totalorder %s18, 1
      %p106 = scmp.ne.s32.totalorder %s101, %s103
      %p107 = scmp.eq.s32.totalorder %s18, 0
      %p108 = por %p106, %p107
      %p109 = scmp.ne.s32.totalorder %s101, %s103
      %p110 = scmp.eq.s32.totalorder %s23, 1
      %p111 = por %p109, %p110
      %p112 = scmp.ne.s32.totalorder %s103, %s104
      %p113 = scmp.eq.s32.totalorder %s23, 0
      %p114 = por %p112, %p113
      %p115 = scmp.ne.s32.totalorder %s103, %s104
      %p116 = scmp.eq.s32.totalorder %s24, 1
      %p117 = por %p115, %p116
      %p119 = scmp.ne.s32.totalorder %s104, %s118
      %p120 = scmp.eq.s32.totalorder %s24, 0
      %p121 = por %p119, %p120
      %s122 = ssub.s32 %s25, %s44
      %s123 = ssub.s32 %s26, %s40
      %s124 = sor.u32 %s122, %s123
      %p125 = scmp.eq.s32.totalorder %s124, 0
      %s127 = sadd.s32 %s126, 1
      %s128 = scalar_select %p125, %s126, %s127
      %p131 = pneg %p125
      %p132 = scmp.eq.s32.totalorder %s18, 1
      %p133 = por %p131, %p132
      %p134 = scmp.ne.s32.totalorder %s126, %s129
      %p135 = scmp.eq.s32.totalorder %s18, 0
      %p136 = por %p134, %p135
      %p137 = scmp.ne.s32.totalorder %s126, %s129
      %p138 = scmp.eq.s32.totalorder %s23, 1
      %p139 = por %p137, %p138
      %p140 = scmp.ne.s32.totalorder %s129, %s130
      %p141 = scmp.eq.s32.totalorder %s23, 0
      %p142 = por %p140, %p141
      %p143 = scmp.ne.s32.totalorder %s129, %s130
      %p144 = scmp.eq.s32.totalorder %s24, 1
      %p145 = por %p143, %p144
      %p147 = scmp.ne.s32.totalorder %s130, %s146
      %p148 = scmp.eq.s32.totalorder %s24, 0
      %p149 = por %p147, %p148
      %p150 = scmp.le.s32.totalorder 1, %s18
      %p151 = scmp.lt.s32.totalorder %s18, 3
      %p152 = pnand %p150, %p151
      %p153 = pneg %p152
      // Predicated region
      $region9: #{tpu_custom_call.1} parent=5 // pred_check
        _
      $region10: #{tpu_custom_call.1} parent=5 // pred_check_branch
        %155 = sbr.rel (%p152) target = $region12
      $region11: #{tpu_custom_call.1} parent=5 // pred_region
        %s156 = ssub.s32 %s18, 1
        // Predicated region
        $region13: #{tpu_custom_call.1} parent=11 // pred_check
          %p157 = pneg %p114
        $region14: #{tpu_custom_call.1} parent=11 // pred_check_branch
          %159 = sbr.rel (%p157) target = $region16
        $region15: #{tpu_custom_call.1} parent=11 // pred_region
          %s161 = ssub.s32 256, 256
          %162 = vsyncadd [#allocation10], %s161
          %s163 = sshll.u32 [#allocation11], 4
          %s164 = int_to_ptr.vmem [resolvable:$true] %s163
          %169 = dma.hbm_to_vmem [thread:$0]  %s2, 256, %s164, [#allocation10], 64, 64, 4
        $region16: #{tpu_custom_call.1} parent=11 // pred_fallthru
          _
      $region12: #{tpu_custom_call.1} parent=5 // pred_fallthru
        _
      %p170 = scmp.lt.s32.totalorder %s18, 2
      // Predicated region
      $region17: #{tpu_custom_call.1} parent=5 // pred_check
        %p171 = pneg %p170
      $region18: #{tpu_custom_call.1} parent=5 // pred_check_branch
        %173 = sbr.rel (%p171) target = $region20
      $region19: #{tpu_custom_call.1} parent=5 // pred_region
        // Predicated region
        $region21: #{tpu_custom_call.1} parent=19 // pred_check
          %p174 = pneg %p59
        $region22: #{tpu_custom_call.1} parent=19 // pred_check_branch
          %176 = sbr.rel (%p174) target = $region24
        $region23: #{tpu_custom_call.1} parent=19 // pred_region
          %s177 = sand.u32 %s49, 1
          %s178 = scalar_lea.sflag [#allocation7], %s177
          %s179 = sand.u32 %s49, 1
          %s180 = smul.addr %s179, 8
          %s181 = scalar_lea.vmem [#allocation6], %s180
          %s183 = ssub.s32 128, 128
          %184 = vsyncadd %s178, %s183
          %s185 = sadd.s32 %s26, %s25
          %s186 = smul.addr %s185, 128
          %s187 = scalar_lea.hbm %s0, %s186
          %s189 = sshll.u32 %s181, 4
          %s190 = int_to_ptr.vmem [resolvable:$true] %s189
          %192 = dma.hbm_to_vmem [thread:$0]  %s187, 128, %s190, %s178
        $region24: #{tpu_custom_call.1} parent=19 // pred_fallthru
          _
        // Predicated region
        $region25: #{tpu_custom_call.1} parent=19 // pred_check
          %p193 = pneg %p87
        $region26: #{tpu_custom_call.1} parent=19 // pred_check_branch
          %195 = sbr.rel (%p193) target = $region28
        $region27: #{tpu_custom_call.1} parent=19 // pred_region
          %s196 = sand.u32 %s18, 1
          %s197 = scalar_lea.sflag [#allocation10], %s196
          %s198 = sand.u32 %s77, 1
          %s199 = smul.addr %s198, 8
          %s200 = scalar_lea.vmem [#allocation9], %s199
          %s202 = ssub.s32 128, 128
          %203 = vsyncadd %s197, %s202
          %s204 = sadd.s32 %s27, %s25
          %s205 = smul.addr %s204, 128
          %s206 = scalar_lea.hbm %s1, %s205
          %s208 = sshll.u32 %s200, 4
          %s209 = int_to_ptr.vmem [resolvable:$true] %s208
          %211 = dma.hbm_to_vmem [thread:$0]  %s206, 128, %s209, %s197
        $region28: #{tpu_custom_call.1} parent=19 // pred_fallthru
          _
      $region20: #{tpu_custom_call.1} parent=5 // pred_fallthru
        _
      %p212 = scmp.le.s32.totalorder 1, %s18
      %p213 = scmp.lt.s32.totalorder %s18, 3
      %p214 = pnand %p212, %p213
      %p215 = pneg %p214
      // Predicated region
      $region29: #{tpu_custom_call.1} parent=5 // pred_check
        _
      $region30: #{tpu_custom_call.1} parent=5 // pred_check_branch
        %217 = sbr.rel (%p214) target = $region32
      $region31: #{tpu_custom_call.1} parent=5 // pred_region
        %s218 = ssub.s32 %s18, 1
        %s219 = sand.u32 %s52, 1
        %s220 = scalar_lea.sflag [#allocation7], %s219
        %s221 = sand.u32 %s52, 1
        %s222 = smul.addr %s221, 8
        %s223 = scalar_lea.vmem [#allocation6], %s222
        // Predicated region
        $region33: #{tpu_custom_call.1} parent=31 // pred_check
          %p224 = pneg %p65
        $region34: #{tpu_custom_call.1} parent=31 // pred_check_branch
          %226 = sbr.rel (%p224) target = $region36
        $region35: #{tpu_custom_call.1} parent=31 // pred_region
          %227 = dma.done %s220, 128
        $region36: #{tpu_custom_call.1} parent=31 // pred_fallthru
          _
        %s228 = sand.u32 %s23, 1
        %s229 = scalar_lea.sflag [#allocation10], %s228
        %s230 = sand.u32 %s80, 1
        %s231 = smul.addr %s230, 8
        %s232 = scalar_lea.vmem [#allocation9], %s231
        // Predicated region
        $region37: #{tpu_custom_call.1} parent=31 // pred_check
          %p233 = pneg %p93
        $region38: #{tpu_custom_call.1} parent=31 // pred_check_branch
          %235 = sbr.rel (%p233) target = $region40
        $region39: #{tpu_custom_call.1} parent=31 // pred_region
          %236 = dma.done %s229, 128
        $region40: #{tpu_custom_call.1} parent=31 // pred_fallthru
          _
        // Predicated region
        $region41: #{tpu_custom_call.1} parent=31 // pred_check
          %p237 = pneg %p114
        $region42: #{tpu_custom_call.1} parent=31 // pred_check_branch
          %239 = sbr.rel (%p237) target = $region44
        $region43: #{tpu_custom_call.1} parent=31 // pred_region
          %240 = dma.done [#allocation10], 256
        $region44: #{tpu_custom_call.1} parent=31 // pred_fallthru
          _
        %s241 = sand.u32 %s52, 1
        %s242 = scalar_lea.sflag [#allocation7], %s241
        %s243 = sand.u32 %s52, 1
        %s244 = smul.addr %s243, 8
        %s245 = scalar_lea.vmem [#allocation6], %s244
        %p246 = pneg %p65
        %p247 = pneg %p62
        %s248 = sand.u32 %s23, 1
        %s249 = scalar_lea.sflag [#allocation10], %s248
        %s250 = sand.u32 %s80, 1
        %s251 = smul.addr %s250, 8
        %s252 = scalar_lea.vmem [#allocation9], %s251
        %p253 = pneg %p93
        %p254 = pneg %p90
        %p255 = pneg %p114
        %p256 = pneg %p111
        %p257 = pneg %p142
        %p258 = pneg %p139
        %s259 = sand.u32 %s129, 1
        %s260 = scalar_lea.sflag [#allocation8], %s259
        %s261 = sand.u32 %s129, 1
        %s262 = smul.addr %s261, 8
        %s263 = scalar_lea.vmem [#allocation12], %s262
        %s265 = smul.u32 %s29, 8
        %s266 = smul.u32 %s30, 8
        %p267 = scmp.eq.s32.totalorder %s30, 0
        // Predicated region
        $region45: #{tpu_custom_call.1} parent=31 // pred_check
          %p268 = pneg %p267
        $region46: #{tpu_custom_call.1} parent=31 // pred_check_branch
          %270 = sbr.rel (%p268) target = $region48
        $region47: #{tpu_custom_call.1} parent=31 // pred_region
          %v271 = vld [vmem:[%s223] sm:$0xff]
          %v272 = vpack.c.bf16 %v271, %v271
          %v273 = vld [vmem:[#allocation11] sm:$0xf]
          %v274 = vld [vmem:[#allocation11 + $0x4] sm:$0xf]
          %v275 = vld [vmem:[#allocation11 + $0x8] sm:$0xf]
          %v276 = vld [vmem:[#allocation11 + $0xc] sm:$0xf]
          %v281 = vunpack.c.l.b16 %v273
          %v282 = vunpack.c.l.b16 %v274
          %v283 = vunpack.c.l.b16 %v275
          %v284 = vunpack.c.l.b16 %v276
          %v285 = vpack.c.b16 %v282, %v281
          %v286 = vpack.c.b16 %v284, %v283
          %vm289 = vcmask 261120
          %v291 = vsel %vm289, %v272, 0
          %293 = vmatprep.subr.bf16.mxu0 0
          %294 = vmatpush1.bf16.msra.mxu0 0
          %295 = vmatprep.subr.bf16.mxu0 0
          %296 = vmatpush1.bf16.msra.mxu0 0
          %297 = vmatprep.subr.bf16.mxu0 0
          %298 = vmatpush1.bf16.msra.mxu0 0
          %299 = vmatprep.subr.bf16.mxu0 0
          %300 = vmatpush1.bf16.msra.mxu0 0
          %301 = vmatprep.subr.bf16.mxu0 0
          %302 = vmatpush1.bf16.msra.mxu0 0
          %303 = vmatprep.subr.bf16.mxu0 0
          %304 = vmatpush1.bf16.msra.mxu0 0
          %305 = vmatprep.subr.bf16.mxu0 0
          %306 = vmatpush1.bf16.msra.mxu0 %v286
          %307 = vmatprep.subr.bf16.mxu0 0
          %308 = vmatpush1.bf16.msra.mxu0 %v285
          %309 = vmatprep.subr.bf16.mxu0 0
          %310 = vmatpush2.bf16.msra.mxu0 0
          %311 = vmatprep.subr.bf16.mxu0 0
          %312 = vmatpush2.bf16.msra.mxu0 0
          %313 = vmatprep.subr.bf16.mxu0 0
          %314 = vmatpush2.bf16.msra.mxu0 0
          %315 = vmatprep.subr.bf16.mxu0 0
          %316 = vmatpush2.bf16.msra.mxu0 0
          %317 = vmatprep.subr.bf16.mxu0 0
          %318 = vmatpush2.bf16.msra.mxu0 0
          %319 = vmatprep.subr.bf16.mxu0 0
          %320 = vmatpush2.bf16.msra.mxu0 0
          %321 = vmatprep.subr.bf16.mxu0 0
          %322 = vmatpush2.bf16.msra.mxu0 0
          %323 = vmatprep.subr.bf16.mxu0 0
          %324 = vmatpush2.bf16.msra.mxu0 0
          %325 = vmatprep.mubr.bf16.mxu0 0
          %326 = vmatmul.mubr.bf16.gmra.mxu0 %v291
          %v327 = vpop.f32.mrf.mxu0
          %v328 = vadd.f32 0.0, %v327
          %v329 = vpop.f32.mrf.mxu0
          %v330 = vpop.f32.mrf.mxu0
          %v331 = vpop.f32.mrf.mxu0
          %332 = vdwg.mxu0
          %v333 = vpack.c.bf16 %v328, %v328
          %vm334 = vcmask 125952
          %335 = vst.msk [vmem:[#allocation2] sm:$0xf] %vm334, %v333
          %vm336 = vcmask 7168
          %337 = vst.msk [vmem:[#allocation3] sm:$0xff] %vm336, -inf
          %338 = vst.msk [vmem:[#allocation4] sm:$0xff] %vm336, 0.0
          %vm339 = vcmask 130048
          %340 = vst.msk [vmem:[#allocation5] sm:$0xff] %vm339, 0.0
        $region48: #{tpu_custom_call.1} parent=31 // pred_fallthru
          _
        %s341 = sadd.s32 %s265, 7
        %p342 = scmp.le.s32.totalorder %s266, %s341
        // Predicated region
        $region49: #{tpu_custom_call.1} parent=31 // pred_check
          %p343 = pneg %p342
        $region50: #{tpu_custom_call.1} parent=31 // pred_check_branch
          %345 = sbr.rel (%p343) target = $region52
        $region51: #{tpu_custom_call.1} parent=31 // pred_region
          %v346 = vld [vmem:[%s232] sm:$0xff]
          %v347 = vpack.c.bf16 %v346, %v346
          %v348 = vld [vmem:[#allocation11] sm:$0xf]
          %v349 = vld [vmem:[#allocation11 + $0x4] sm:$0xf]
          %v350 = vld [vmem:[#allocation11 + $0x8] sm:$0xf]
          %v351 = vld [vmem:[#allocation11 + $0xc] sm:$0xf]
          %v356 = vunpack.c.l.b16 %v348
          %v357 = vunpack.c.l.b16 %v349
          %v358 = vunpack.c.l.b16 %v350
          %v359 = vunpack.c.l.b16 %v351
          %v360 = vpack.c.b16 %v357, %v356
          %v361 = vpack.c.b16 %v359, %v358
          %362 = vrot.lane.b32.xlu0 %v360, 112
          %v363 = vpop.permute.xlu0 %362
          %364 = vrot.lane.b32.xlu0 %v361, 112
          %v365 = vpop.permute.xlu0 %364
          %vm368 = vcmask 261120
          %v370 = vsel %vm368, %v347, 0
          %372 = vmatprep.subr.bf16.mxu0 0
          %373 = vmatpush1.bf16.msra.mxu0 0
          %374 = vmatprep.subr.bf16.mxu0 0
          %375 = vmatpush1.bf16.msra.mxu0 0
          %376 = vmatprep.subr.bf16.mxu0 0
          %377 = vmatpush1.bf16.msra.mxu0 0
          %378 = vmatprep.subr.bf16.mxu0 0
          %379 = vmatpush1.bf16.msra.mxu0 0
          %380 = vmatprep.subr.bf16.mxu0 0
          %381 = vmatpush1.bf16.msra.mxu0 0
          %382 = vmatprep.subr.bf16.mxu0 0
          %383 = vmatpush1.bf16.msra.mxu0 0
          %384 = vmatprep.subr.bf16.mxu0 0
          %385 = vmatpush1.bf16.msra.mxu0 %v365
          %386 = vmatprep.subr.bf16.mxu0 0
          %387 = vmatpush1.bf16.msra.mxu0 %v363
          %388 = vmatprep.subr.bf16.mxu0 0
          %389 = vmatpush2.bf16.msra.mxu0 0
          %390 = vmatprep.subr.bf16.mxu0 0
          %391 = vmatpush2.bf16.msra.mxu0 0
          %392 = vmatprep.subr.bf16.mxu0 0
          %393 = vmatpush2.bf16.msra.mxu0 0
          %394 = vmatprep.subr.bf16.mxu0 0
          %395 = vmatpush2.bf16.msra.mxu0 0
          %396 = vmatprep.subr.bf16.mxu0 0
          %397 = vmatpush2.bf16.msra.mxu0 0
          %398 = vmatprep.subr.bf16.mxu0 0
          %399 = vmatpush2.bf16.msra.mxu0 0
          %400 = vmatprep.subr.bf16.mxu0 0
          %401 = vmatpush2.bf16.msra.mxu0 0
          %402 = vmatprep.subr.bf16.mxu0 0
          %403 = vmatpush2.bf16.msra.mxu0 0
          %404 = vmatprep.mubr.bf16.mxu0 0
          %405 = vmatmul.mubr.bf16.gmra.mxu0 %v370
          %v406 = vpop.f32.mrf.mxu0
          %v407 = vadd.f32 0.0, %v406
          %v408 = vpop.f32.mrf.mxu0
          %v409 = vpop.f32.mrf.mxu0
          %v410 = vpop.f32.mrf.mxu0
          %411 = vdwg.mxu0
          %v412 = vpack.c.bf16 %v407, %v407
          %v413 = vld [vmem:[#allocation2] sm:$0xf]
          %vm414 = vcmask 130048
          %v416 = vsel %vm414, %v413, 0
          %v419 = vsel %vm414, %v412, 0
          %421 = vmatprep.subr.bf16.mxu0 0
          %422 = vmatpush1.bf16.xpose.msra.mxu0 0
          %423 = vmatprep.subr.bf16.mxu0 0
          %424 = vmatpush1.bf16.xpose.msra.mxu0 0
          %425 = vmatprep.subr.bf16.mxu0 0
          %426 = vmatpush1.bf16.xpose.msra.mxu0 0
          %427 = vmatprep.subr.bf16.mxu0 0
          %428 = vmatpush1.bf16.xpose.msra.mxu0 0
          %429 = vmatprep.subr.bf16.mxu0 0
          %430 = vmatpush1.bf16.xpose.msra.mxu0 0
          %431 = vmatprep.subr.bf16.mxu0 0
          %432 = vmatpush1.bf16.xpose.msra.mxu0 0
          %433 = vmatprep.subr.bf16.mxu0 0
          %434 = vmatpush1.bf16.xpose.msra.mxu0 0
          %435 = vmatprep.subr.bf16.mxu0 0
          %436 = vmatpush1.bf16.xpose.msra.mxu0 %v419
          %437 = vmatprep.subr.bf16.mxu0 0
          %438 = vmatpush2.bf16.xpose.msra.mxu0 0
          %439 = vmatprep.subr.bf16.mxu0 0
          %440 = vmatpush2.bf16.xpose.msra.mxu0 0
          %441 = vmatprep.subr.bf16.mxu0 0
          %442 = vmatpush2.bf16.xpose.msra.mxu0 0
          %443 = vmatprep.subr.bf16.mxu0 0
          %444 = vmatpush2.bf16.xpose.msra.mxu0 0
          %445 = vmatprep.subr.bf16.mxu0 0
          %446 = vmatpush2.bf16.xpose.msra.mxu0 0
          %447 = vmatprep.subr.bf16.mxu0 0
          %448 = vmatpush2.bf16.xpose.msra.mxu0 0
          %449 = vmatprep.subr.bf16.mxu0 0
          %450 = vmatpush2.bf16.xpose.msra.mxu0 0
          %451 = vmatprep.subr.bf16.mxu0 0
          %452 = vmatpush2.bf16.xpose.msra.mxu0 0
          %453 = vmatprep.mubr.bf16.mxu0 0
          %454 = vmatmul.mubr.bf16.gmra.mxu0 %v416
          %v455 = vpop.f32.mrf.mxu0
          %v456 = vadd.f32 0.0, %v455
          %v457 = vpop.f32.mrf.mxu0
          %v458 = vpop.f32.mrf.mxu0
          %v459 = vpop.f32.mrf.mxu0
          %460 = vdwg.mxu0
          %v461 = vlaneseq
          %v462 = vshrl.u32 %v461, 7
          %v463 = vstv %s265
          %v464 = vadd.s32 %v463, %v462
          %v465 = vlaneseq
          %v466 = vand.u32 %v465, 127
          %v467 = vstv %s266
          %v468 = vadd.s32 %v467, %v466
          %vm469 = vcmp.ge.s32.totalorder %v464, %v468
          %v470 = vsel %vm469, %v456, -inf
          %v471 = vld [vmem:[#allocation3] sm:$0xff]
          %vm472 = vcmask 64512
          %v473 = vsel %vm472, %v470, -inf
          %474 = vmax.xlane.f32.xlu0 %v473
          %v475 = vpop.xlane.xlu0 %474
          %v476 = vmax.f32 %v471, %v475
          %v477 = vsub.f32 %v471, %v476
          %v478 = vmul.f32 %v477, 1.442695
          %v479 = vpow.pop %v478
          %481 = vset.pattern.permute.xlu0 0
          %482 = vperm.xlu0 %481, %v476
          %v483 = vpop.permute.xlu0 %482
          %v485 = vsub.f32 %v470, %v483
          %v486 = vpack.c.bf16 %v485, %v485
          %v488 = vmul.bf16 %v486, 1069105081
          %v489 = vpow.bf16.pop %v488
          %v490 = vunpack.c.l.bf16 %v489
          %v491 = vld [vmem:[#allocation4] sm:$0xff]
          %v492 = vmul.f32 %v479, %v491
          %v493 = vsel %vm472, %v490, 0.0
          %494 = vadd.xlane.f32.xlu0 %v493
          %v495 = vpop.xlane.xlu0 %494
          %v496 = vadd.f32 %v492, %v495
          %vm497 = vcmask 7168
          %498 = vst.msk [vmem:[#allocation4] sm:$0xff] %vm497, %v496
          %v499 = vld [vmem:[#allocation5] sm:$0xff]
          %501 = vset.pattern.permute.xlu0 0
          %502 = vperm.xlu0 %501, %v479
          %v503 = vpop.permute.xlu0 %502
          %v505 = vmul.f32 %v503, %v499
          %507 = vrot.lane.b32.xlu0 %v412, 112
          %v508 = vpop.permute.xlu0 %507
          %v510 = vsel %vm472, %v489, 0
          %vm512 = vcmask 1043456
          %v514 = vsel %vm512, %v508, 0
          %516 = vmatprep.subr.bf16.mxu0 0
          %517 = vmatpush1.bf16.msra.mxu0 0
          %518 = vmatprep.subr.bf16.mxu0 0
          %519 = vmatpush1.bf16.msra.mxu0 0
          %520 = vmatprep.subr.bf16.mxu0 0
          %521 = vmatpush1.bf16.msra.mxu0 0
          %522 = vmatprep.subr.bf16.mxu0 0
          %523 = vmatpush1.bf16.msra.mxu0 0
          %524 = vmatprep.subr.bf16.mxu0 0
          %525 = vmatpush1.bf16.msra.mxu0 0
          %526 = vmatprep.subr.bf16.mxu0 0
          %527 = vmatpush1.bf16.msra.mxu0 0
          %528 = vmatprep.subr.bf16.mxu0 0
          %529 = vmatpush1.bf16.msra.mxu0 0
          %530 = vmatprep.subr.bf16.mxu0 0
          %531 = vmatpush1.bf16.msra.mxu0 %v514
          %532 = vmatprep.subr.bf16.mxu0 0
          %533 = vmatpush2.bf16.msra.mxu0 0
          %534 = vmatprep.subr.bf16.mxu0 0
          %535 = vmatpush2.bf16.msra.mxu0 0
          %536 = vmatprep.subr.bf16.mxu0 0
          %537 = vmatpush2.bf16.msra.mxu0 0
          %538 = vmatprep.subr.bf16.mxu0 0
          %539 = vmatpush2.bf16.msra.mxu0 0
          %540 = vmatprep.subr.bf16.mxu0 0
          %541 = vmatpush2.bf16.msra.mxu0 0
          %542 = vmatprep.subr.bf16.mxu0 0
          %543 = vmatpush2.bf16.msra.mxu0 0
          %544 = vmatprep.subr.bf16.mxu0 0
          %545 = vmatpush2.bf16.msra.mxu0 0
          %546 = vmatprep.subr.bf16.mxu0 0
          %547 = vmatpush2.bf16.msra.mxu0 0
          %548 = vmatprep.mubr.bf16.mxu0 0
          %549 = vmatmul.mubr.bf16.gmra.mxu0 %v510
          %v550 = vpop.f32.mrf.mxu0
          %v551 = vadd.f32 0.0, %v550
          %v552 = vpop.f32.mrf.mxu0
          %v553 = vpop.f32.mrf.mxu0
          %v554 = vpop.f32.mrf.mxu0
          %555 = vdwg.mxu0
          %v556 = vadd.f32 %v505, %v551
          %557 = vst.msk [vmem:[#allocation5] sm:$0xff] %vm414, %v556
          %558 = vst.msk [vmem:[#allocation3] sm:$0xff] %vm497, %v476
        $region52: #{tpu_custom_call.1} parent=31 // pred_fallthru
          _
        // Predicated region
        $region53: #{tpu_custom_call.1} parent=31 // pred_check
          %p559 = pneg %p267
        $region54: #{tpu_custom_call.1} parent=31 // pred_check_branch
          %561 = sbr.rel (%p559) target = $region56
        $region55: #{tpu_custom_call.1} parent=31 // pred_region
          %v562 = vld [vmem:[#allocation4] sm:$0xff]
          %v563 = vrcp.pop %v562
          %v564 = vld [vmem:[#allocation5] sm:$0xff]
          %566 = vset.pattern.permute.xlu0 0
          %567 = vperm.xlu0 %566, %v563
          %v568 = vpop.permute.xlu0 %567
          %v570 = vmul.f32 %v564, %v568
          %vm571 = vcmask 130048
          %572 = vst.msk [vmem:[%s263] sm:$0xff] %vm571, %v570
        $region56: #{tpu_custom_call.1} parent=31 // pred_fallthru
          _
        %s573 = sand.u32 %s129, 1
        %s574 = scalar_lea.sflag [#allocation8], %s573
        %s575 = sand.u32 %s129, 1
        %s576 = smul.addr %s575, 8
        %s577 = scalar_lea.vmem [#allocation12], %s576
        // Predicated region
        $region57: #{tpu_custom_call.1} parent=31 // pred_check
          %p578 = pneg %p139
        $region58: #{tpu_custom_call.1} parent=31 // pred_check_branch
          %580 = sbr.rel (%p578) target = $region60
        $region59: #{tpu_custom_call.1} parent=31 // pred_region
          %s582 = ssub.s32 128, 128
          %583 = vsyncadd %s574, %s582
          %s584 = sadd.s32 %s29, %s28
          %s585 = smul.addr %s584, 128
          %s586 = scalar_lea.hbm %s3, %s585
          %s588 = sshll.u32 %s577, 4
          %s589 = int_to_ptr.vmem [resolvable:$true] %s588
          %591 = dma.vmem_to_hbm [thread:$0]  %s589, 128, %s586, %s574
        $region60: #{tpu_custom_call.1} parent=31 // pred_fallthru
          _
      $region32: #{tpu_custom_call.1} parent=5 // pred_fallthru
        _
      %p592 = scmp.le.s32.totalorder 2, %s18
      // Predicated region
      $region61: #{tpu_custom_call.1} parent=5 // pred_check
        %p593 = pneg %p592
      $region62: #{tpu_custom_call.1} parent=5 // pred_check_branch
        %595 = sbr.rel (%p593) target = $region64
      $region63: #{tpu_custom_call.1} parent=5 // pred_region
        %s596 = ssub.s32 %s18, 2
        // Predicated region
        $region65: #{tpu_custom_call.1} parent=63 // pred_check
          %p597 = pneg %p145
        $region66: #{tpu_custom_call.1} parent=63 // pred_check_branch
          %599 = sbr.rel (%p597) target = $region68
        $region67: #{tpu_custom_call.1} parent=63 // pred_region
          %s600 = sand.u32 %s130, 1
          %s601 = scalar_lea.sflag [#allocation8], %s600
          %s602 = sand.u32 %s130, 1
          %s603 = smul.addr %s602, 8
          %s604 = scalar_lea.vmem [#allocation12], %s603
          %605 = dma.done %s601, 128
        $region68: #{tpu_custom_call.1} parent=63 // pred_fallthru
          _
      $region64: #{tpu_custom_call.1} parent=5 // pred_fallthru
        _
    $region6: #{tpu_custom_call.1} parent=1 // loop_footer
      %s22 = sadd.s32 1, %s18
    $region7: #{tpu_custom_call.1} parent=1 // loop_footer_branch
      %17 = sbr.rel target = $region3
    $region8: #{tpu_custom_call.1} parent=1 // loop_exit
      _
    %606 = vsyncpa [#allocation7], 1
    %s607 = scalar_lea.sflag [#allocation7], 1
    %608 = vsyncpa %s607, 1
    %609 = vsyncpa [#allocation10], 1
    %s610 = scalar_lea.sflag [#allocation10], 1
    %611 = vsyncpa %s610, 1
    %612 = vsyncpa [#allocation8], 1
    %s613 = scalar_lea.sflag [#allocation8], 1
    %614 = vsyncpa %s613, 1

</llo_original>
